<compile_context>
chip_gen: v7x
topology: tpu7x:2x2x1
jax: 0.10.0
libtpu: 0.0.40
codegen_flags: <defaults>
</compile_context>

<pallas_src>
import math
import functools

import jax
import jax.numpy as jnp
from jax.experimental import pallas as pl
from jax.experimental.pallas import tpu as pltpu


def _attn_kernel(x_ref, wqkv_ref, bqkv_ref, wp_ref, bp_ref, out_ref,
                 qkv_scr, y_scr, *, n_head, head_dim, group_heads):
    """One grid step == one batch element.

    x_ref    : (T, C)   VMEM bf16 (batch squeezed by BlockSpec, pre-cast host-side)
    wqkv_ref : (C, 3C)  VMEM bf16, pre-transposed, packed [q*scale | k | v]
    bqkv_ref : (1, 3C)  VMEM f32  (q-bias pre-scaled)
    wp_ref   : (C, C)   VMEM bf16, pre-transposed
    bp_ref   : (1, C)   VMEM f32
    out_ref  : (T, C)   VMEM f32
    qkv_scr  : (T, 3C)  VMEM bf16 scratch — staged q/k/v
    y_scr    : (T, C)   VMEM bf16 scratch — per-head-group context
    """
    T, C = x_ref.shape

    # --- fused q/k/v projection: one (T,C)x(C,3C) bf16 MXU matmul, f32 acc ---
    qkv = jnp.dot(x_ref[...], wqkv_ref[...], preferred_element_type=jnp.float32)
    qkv_scr[...] = (qkv + bqkv_ref[...]).astype(jnp.bfloat16)

    # --- additive causal mask, built once per grid step, reused by all heads.
    # Kept f32 so the -1e30 bias / max-subtraction never see bf16 overflow.
    rows = jax.lax.broadcasted_iota(jnp.int32, (T, T), 0)
    cols = jax.lax.broadcasted_iota(jnp.int32, (T, T), 1)
    mask_bias = jnp.where(rows >= cols, jnp.float32(0.0), jnp.float32(-1e30))
    # TODO(synk): for long sequences (T >= ~512) switch to a flash-style
    # (B, T//TQ) grid with online softmax, per-(TQ,TK)-tile mask generation and
    # causal block skipping; the monolithic per-batch form targets small/medium T.

    group_w = group_heads * head_dim
    n_groups = n_head // group_heads

    def compute_group(base):
        parts = []
        for h in range(group_heads):
            off = base + h * head_dim
            qh = qkv_scr[:, pl.ds(off, head_dim)]            # bf16, scale folded in
            kh = qkv_scr[:, pl.ds(C + off, head_dim)]
            vh = qkv_scr[:, pl.ds(2 * C + off, head_dim)]

            # scores: contract head_dim of q against head_dim of k (no k.T copy)
            att = jnp.einsum('td,sd->ts', qh, kh,
                             preferred_element_type=jnp.float32)
            att = att + mask_bias
            att = att - jnp.max(att, axis=-1, keepdims=True)
            p = jnp.exp(att)                                  # f32 (EUP)
            # TODO(synk): on v6e/v7x the exp could run in bf16 on the EUP for ~2x
            # transcendental throughput (keep the row-sum in f32); v5e has no
            # bf16 EUP path, so it is kept f32 here.
            denom = jnp.sum(p, axis=-1, keepdims=True)

            # PV matmul on UNNORMALIZED p (entries in [0,1], safe in bf16);
            # normalize afterwards on (T, head_dim) instead of (T, T).
            yh = jnp.dot(p.astype(jnp.bfloat16), vh,
                         preferred_element_type=jnp.float32)
            yh = yh * pl.reciprocal(denom, approx=True)
            parts.append(yh.astype(jnp.bfloat16))

        y_grp = parts[0] if group_heads == 1 else jnp.concatenate(parts, axis=-1)
        y_scr[:, pl.ds(base, group_w)] = y_grp                # lane-dense grouped store

    if n_groups <= 2:
        # Few groups: static unroll keeps only a couple of (T,T) intermediates live.
        for g in range(n_groups):
            compute_group(g * group_w)
    else:
        # Many groups: fori_loop bounds live ranges (no per-head spill blowup).
        def body(g, carry):
            compute_group(pl.multiple_of(g * group_w, group_w))
            return carry
        jax.lax.fori_loop(0, n_groups, body, 0)

    # --- output projection (weights pre-transposed, y_scr already bf16) ---
    out = jnp.dot(y_scr[...], wp_ref[...], preferred_element_type=jnp.float32)
    out_ref[...] = (out + bp_ref[...]).astype(out_ref.dtype)


def causal_self_attention(x, params, n_head):
    """x: (B, T, C) float32. params: dict of PyTorch-convention weights/biases.

    Returns (B, T, C) float32 matching CausalSelfAttention.forward (eval mode,
    boundary=None).
    """
    B, T, C = x.shape
    assert C % n_head == 0
    head_dim = C // n_head

    # Group heads so the y_scr store (and the PV output width) is as lane-dense
    # as possible: group_heads * head_dim ~ 128 lanes when head_dim < 128.
    if head_dim >= 128:
        group_heads = 1
    else:
        group_heads = max(1, min(n_head, 128 // head_dim))
        while n_head % group_heads:
            group_heads -= 1

    scale = 1.0 / math.sqrt(head_dim)

    def as_row(b):
        # PyTorch nn.Linear biases are (C,); also accept pre-shaped (1, C).
        return jnp.asarray(b, jnp.float32).reshape(1, -1)

    # Host-side packing (done once, outside the kernel):
    #   W_qkv^T : (C, 3C) bf16, column blocks [q*scale | k | v] (scale folded in)
    #   b_qkv   : (1, 3C) f32  (q bias pre-scaled)
    #   W_p^T   : (C, C)  bf16
    w_qkv_t = jnp.concatenate(
        [params["wq"].T * scale, params["wk"].T, params["wv"].T], axis=1
    ).astype(jnp.bfloat16)
    b_qkv = jnp.concatenate(
        [as_row(params["bq"]) * scale, as_row(params["bk"]), as_row(params["bv"])],
        axis=1)
    wp_t = params["wp"].T.astype(jnp.bfloat16)
    bp = as_row(params["bp"])

    x_bf16 = x.astype(jnp.bfloat16)   # halves HBM->VMEM DMA + x VMEM footprint

    kernel = functools.partial(_attn_kernel, n_head=n_head, head_dim=head_dim,
                               group_heads=group_heads)

    x_spec = pl.BlockSpec((None, T, C), lambda b: (b, 0, 0))   # squeeze batch
    o_spec = pl.BlockSpec((None, T, C), lambda b: (b, 0, 0))
    # Grid-invariant weights: block index never changes, so they are DMA'd once.
    # TODO(synk): single-buffer these (pl.Buffered(1) or pl.ANY + staged copy) to
    # halve their VMEM footprint for large C on v7x's 64 MiB VMEM.
    wqkv_spec = pl.BlockSpec((C, 3 * C), lambda b: (0, 0))
    bqkv_spec = pl.BlockSpec((1, 3 * C), lambda b: (0, 0))
    wp_spec = pl.BlockSpec((C, C), lambda b: (0, 0))
    bp_spec = pl.BlockSpec((1, C), lambda b: (0, 0))

    return pl.pallas_call(
        kernel,
        out_shape=jax.ShapeDtypeStruct((B, T, C), jnp.float32),
        grid_spec=pltpu.PrefetchScalarGridSpec(
            num_scalar_prefetch=0,
            grid=(B,),
            in_specs=[x_spec, wqkv_spec, bqkv_spec, wp_spec, bp_spec],
            out_specs=o_spec,
            scratch_shapes=[pltpu.VMEM((T, 3 * C), jnp.bfloat16),   # staged qkv
                            pltpu.VMEM((T, C), jnp.bfloat16)],      # context
        ),
        # TODO(synk): on v7x add a second "parallel" grid axis (head group or
        # query tile) so both TensorCores stay busy when B is 1 or odd.
        compiler_params=pltpu.CompilerParams(
            dimension_semantics=("parallel",),
            # Explicit scoped-VMEM budget: above v5e's 16 MiB default, below
            # v7x's 64 MiB physical; raise toward ~96 MiB on v5e/v6e for big C/T.
            vmem_limit_bytes=48 * 1024 * 1024,
        ),
    )(x_bf16, w_qkv_t, b_qkv, wp_t, bp)


def _reference(x, params, n_head):
    """Pure-JAX f32 reference mirroring the PyTorch forward (eval mode)."""
    B, T, C = x.shape
    hd = C // n_head

    def lin(a, w, b):
        return a @ w.T + b

    q = lin(x, params["wq"], params["bq"]).reshape(B, T, n_head, hd).transpose(0, 2, 1, 3)
    k = lin(x, params["wk"], params["bk"]).reshape(B, T, n_head, hd).transpose(0, 2, 1, 3)
    v = lin(x, params["wv"], params["bv"]).reshape(B, T, n_head, hd).transpose(0, 2, 1, 3)

    att = jnp.einsum("bhtd,bhsd->bhts", q, k) * (1.0 / math.sqrt(hd))
    mask = jnp.tril(jnp.ones((T, T), bool))
    att = jnp.where(mask[None, None], att, -jnp.inf)
    att = jax.nn.softmax(att, axis=-1)
    y = jnp.einsum("bhts,bhsd->bhtd", att, v)
    y = y.transpose(0, 2, 1, 3).reshape(B, T, C)
    return lin(y, params["wp"], params["bp"])


if __name__ == "__main__":
    # Small config consistent with the module: block_size >= T.
    B, T, C, n_head = 2, 8, 32, 4

    key = jax.random.PRNGKey(0)
    keys = jax.random.split(key, 9)

    def init_w(k):
        return (0.02 * jax.random.normal(k, (C, C))).astype(jnp.float32)

    def init_b(k):
        # PyTorch nn.Linear bias shape (C,) — exercised on purpose.
        return (0.02 * jax.random.normal(k, (C,))).astype(jnp.float32)

    params = {
        "wq": init_w(keys[0]), "bq": init_b(keys[1]),
        "wk": init_w(keys[2]), "bk": init_b(keys[3]),
        "wv": init_w(keys[4]), "bv": init_b(keys[5]),
        "wp": init_w(keys[6]), "bp": init_b(keys[7]),
    }
    x = jax.random.normal(keys[8], (B, T, C), dtype=jnp.float32)

    out = causal_self_attention(x, params, n_head)
    out = jax.block_until_ready(out)

    ref = _reference(x, params, n_head)
    assert out.shape == (B, T, C)
    max_err = float(jnp.max(jnp.abs(out - ref)))
    # bf16 MXU inputs + approx reciprocal -> relaxed (but still tight) bound.
    assert max_err < 2e-2, f"max abs err = {max_err}"

    print("KERNEL_OK")
</pallas_src>

<mosaic_0001>
module attributes {stable_mosaic.version = 11 : i64} {
  func.func @_attn_kernel(%arg0: i32, %arg1: memref<1x8x32xbf16, #tpu.memory_space<vmem>>, %arg2: memref<32x96xbf16, #tpu.memory_space<vmem>>, %arg3: memref<1x96xf32, #tpu.memory_space<vmem>>, %arg4: memref<32x32xbf16, #tpu.memory_space<vmem>>, %arg5: memref<1x32xf32, #tpu.memory_space<vmem>>, %arg6: memref<1x8x32xf32, #tpu.memory_space<vmem>>, %arg7: memref<8x96xbf16, #tpu.memory_space<vmem>>, %arg8: memref<8x32xbf16, #tpu.memory_space<vmem>>) attributes {dimension_semantics = [#tpu.dimension_semantics<parallel>], iteration_bounds = array<i64: 2>, scalar_prefetch = 0 : i64, scratch_operands = 2 : i64, tpu.core_type = #tpu.core_type<tc>, window_params = [{transform_indices = @transform_0, window_bounds = array<i64: 1, 8, 32>}, {pipeline_mode = #tpu.pipeline_mode<synchronous>, transform_indices = @transform_1, window_bounds = array<i64: 32, 96>}, {pipeline_mode = #tpu.pipeline_mode<synchronous>, transform_indices = @transform_2, window_bounds = array<i64: 1, 96>}, {pipeline_mode = #tpu.pipeline_mode<synchronous>, transform_indices = @transform_3, window_bounds = array<i64: 32, 32>}, {pipeline_mode = #tpu.pipeline_mode<synchronous>, transform_indices = @transform_4, window_bounds = array<i64: 1, 32>}, {transform_indices = @transform_5, window_bounds = array<i64: 1, 8, 32>}]} {
    %c0 = arith.constant 0 : index
    %c0_0 = arith.constant 0 : index
    %c0_1 = arith.constant 0 : index
    %0 = vector.load %arg1[%c0, %c0_0, %c0_1] : memref<1x8x32xbf16, #tpu.memory_space<vmem>>, vector<1x8x32xbf16>
    %1 = vector.shape_cast %0 : vector<1x8x32xbf16> to vector<8x32xbf16>
    %c0_2 = arith.constant 0 : index
    %c0_3 = arith.constant 0 : index
    %2 = vector.load %arg2[%c0_2, %c0_3] : memref<32x96xbf16, #tpu.memory_space<vmem>>, vector<32x96xbf16>
    %cst = arith.constant dense<0.000000e+00> : vector<8x96xf32>
    %3 = tpu.matmul %1, %2, %cst {dimension_numbers = #tpu.dot_dimension_numbers<[1], [0], [0], [1], [0, 0, 1, 1], [], []>} : vector<8x32xbf16>, vector<32x96xbf16>, vector<8x96xf32> -> vector<8x96xf32>
    %c0_4 = arith.constant 0 : index
    %c0_5 = arith.constant 0 : index
    %4 = vector.load %arg3[%c0_4, %c0_5] : memref<1x96xf32, #tpu.memory_space<vmem>>, vector<1x96xf32>
    %5 = vector.broadcast %4 : vector<1x96xf32> to vector<8x96xf32>
    %6 = arith.addf %3, %5 : vector<8x96xf32>
    %7 = arith.truncf %6 : vector<8x96xf32> to vector<8x96xbf16>
    %c0_6 = arith.constant 0 : index
    %c0_7 = arith.constant 0 : index
    %8 = vector.load %arg7[%c0_6, %c0_7] : memref<8x96xbf16, #tpu.memory_space<vmem>>, vector<8x96xbf16>
    tpu.vector_store %arg7[%c0_6, %c0_7], %7 {strides = array<i32>} : memref<8x96xbf16, #tpu.memory_space<vmem>>, vector<8x96xbf16>,
    %9 = tpu.iota {dimensions = array<i32: 0>} : vector<8x8xi32>
    %10 = tpu.iota {dimensions = array<i32: 1>} : vector<8x8xi32>
    %11 = arith.cmpi sge, %9, %10 : vector<8x8xi32>
    %cst_8 = arith.constant 0.000000e+00 : f32
    %cst_9 = arith.constant -1.000000e+30 : f32
    %12 = vector.broadcast %cst_8 : f32 to vector<8x8xf32>
    %13 = vector.broadcast %cst_9 : f32 to vector<8x8xf32>
    %14 = arith.select %11, %12, %13 : vector<8x8xi1>, vector<8x8xf32>
    %c0_10 = arith.constant 0 : index
    %c0_11 = arith.constant 0 : index
    %15 = vector.load %arg7[%c0_10, %c0_11] : memref<8x96xbf16, #tpu.memory_space<vmem>>, vector<8x8xbf16>
    %c0_12 = arith.constant 0 : index
    %c32 = arith.constant 32 : index
    %16 = vector.load %arg7[%c0_12, %c32] : memref<8x96xbf16, #tpu.memory_space<vmem>>, vector<8x8xbf16>
    %c0_13 = arith.constant 0 : index
    %c64 = arith.constant 64 : index
    %17 = vector.load %arg7[%c0_13, %c64] : memref<8x96xbf16, #tpu.memory_space<vmem>>, vector<8x8xbf16>
    "tpu.trace_start"() <{level = 10 : i32, message = "td,sd->ts"}> : () -> ()
    %cst_14 = arith.constant dense<0.000000e+00> : vector<8x8xf32>
    %18 = tpu.matmul %15, %16, %cst_14 {dimension_numbers = #tpu.dot_dimension_numbers<[1], [1], [0], [0], [0, 0, 1, 0], [], []>} : vector<8x8xbf16>, vector<8x8xbf16>, vector<8x8xf32> -> vector<8x8xf32>
    "tpu.trace_stop"() : () -> ()
    %19 = arith.addf %18, %14 : vector<8x8xf32>
    %cst_15 = arith.constant dense<0xFF800000> : vector<8xf32>
    %20 = vector.multi_reduction <maximumf>, %19, %cst_15 [1] : vector<8x8xf32> to vector<8xf32>
    %21 = vector.shape_cast %20 : vector<8xf32> to vector<8x1xf32>
    %22 = vector.broadcast %21 : vector<8x1xf32> to vector<8x8xf32>
    %23 = arith.subf %19, %22 : vector<8x8xf32>
    %24 = math.exp %23 : vector<8x8xf32>
    %cst_16 = arith.constant dense<0.000000e+00> : vector<8xf32>
    %25 = vector.multi_reduction <add>, %24, %cst_16 [1] : vector<8x8xf32> to vector<8xf32>
    %26 = vector.shape_cast %25 : vector<8xf32> to vector<8x1xf32>
    %27 = arith.truncf %24 : vector<8x8xf32> to vector<8x8xbf16>
    %cst_17 = arith.constant dense<0.000000e+00> : vector<8x8xf32>
    %28 = tpu.matmul %27, %17, %cst_17 {dimension_numbers = #tpu.dot_dimension_numbers<[1], [0], [0], [1], [0, 0, 1, 1], [], []>} : vector<8x8xbf16>, vector<8x8xbf16>, vector<8x8xf32> -> vector<8x8xf32>
    %29 = tpu.reciprocal %26 {approx = true} : vector<8x1xf32> -> vector<8x1xf32>
    %30 = vector.broadcast %29 : vector<8x1xf32> to vector<8x8xf32>
    %31 = arith.mulf %28, %30 : vector<8x8xf32>
    %32 = arith.truncf %31 : vector<8x8xf32> to vector<8x8xbf16>
    %c0_18 = arith.constant 0 : index
    %c8 = arith.constant 8 : index
    %33 = vector.load %arg7[%c0_18, %c8] : memref<8x96xbf16, #tpu.memory_space<vmem>>, vector<8x8xbf16>
    %c0_19 = arith.constant 0 : index
    %c40 = arith.constant 40 : index
    %34 = vector.load %arg7[%c0_19, %c40] : memref<8x96xbf16, #tpu.memory_space<vmem>>, vector<8x8xbf16>
    %c0_20 = arith.constant 0 : index
    %c72 = arith.constant 72 : index
    %35 = vector.load %arg7[%c0_20, %c72] : memref<8x96xbf16, #tpu.memory_space<vmem>>, vector<8x8xbf16>
    "tpu.trace_start"() <{level = 10 : i32, message = "td,sd->ts"}> : () -> ()
    %cst_21 = arith.constant dense<0.000000e+00> : vector<8x8xf32>
    %36 = tpu.matmul %33, %34, %cst_21 {dimension_numbers = #tpu.dot_dimension_numbers<[1], [1], [0], [0], [0, 0, 1, 0], [], []>} : vector<8x8xbf16>, vector<8x8xbf16>, vector<8x8xf32> -> vector<8x8xf32>
    "tpu.trace_stop"() : () -> ()
    %37 = arith.addf %36, %14 : vector<8x8xf32>
    %cst_22 = arith.constant dense<0xFF800000> : vector<8xf32>
    %38 = vector.multi_reduction <maximumf>, %37, %cst_22 [1] : vector<8x8xf32> to vector<8xf32>
    %39 = vector.shape_cast %38 : vector<8xf32> to vector<8x1xf32>
    %40 = vector.broadcast %39 : vector<8x1xf32> to vector<8x8xf32>
    %41 = arith.subf %37, %40 : vector<8x8xf32>
    %42 = math.exp %41 : vector<8x8xf32>
    %cst_23 = arith.constant dense<0.000000e+00> : vector<8xf32>
    %43 = vector.multi_reduction <add>, %42, %cst_23 [1] : vector<8x8xf32> to vector<8xf32>
    %44 = vector.shape_cast %43 : vector<8xf32> to vector<8x1xf32>
    %45 = arith.truncf %42 : vector<8x8xf32> to vector<8x8xbf16>
    %cst_24 = arith.constant dense<0.000000e+00> : vector<8x8xf32>
    %46 = tpu.matmul %45, %35, %cst_24 {dimension_numbers = #tpu.dot_dimension_numbers<[1], [0], [0], [1], [0, 0, 1, 1], [], []>} : vector<8x8xbf16>, vector<8x8xbf16>, vector<8x8xf32> -> vector<8x8xf32>
    %47 = tpu.reciprocal %44 {approx = true} : vector<8x1xf32> -> vector<8x1xf32>
    %48 = vector.broadcast %47 : vector<8x1xf32> to vector<8x8xf32>
    %49 = arith.mulf %46, %48 : vector<8x8xf32>
    %50 = arith.truncf %49 : vector<8x8xf32> to vector<8x8xbf16>
    %c0_25 = arith.constant 0 : index
    %c16 = arith.constant 16 : index
    %51 = vector.load %arg7[%c0_25, %c16] : memref<8x96xbf16, #tpu.memory_space<vmem>>, vector<8x8xbf16>
    %c0_26 = arith.constant 0 : index
    %c48 = arith.constant 48 : index
    %52 = vector.load %arg7[%c0_26, %c48] : memref<8x96xbf16, #tpu.memory_space<vmem>>, vector<8x8xbf16>
    %c0_27 = arith.constant 0 : index
    %c80 = arith.constant 80 : index
    %53 = vector.load %arg7[%c0_27, %c80] : memref<8x96xbf16, #tpu.memory_space<vmem>>, vector<8x8xbf16>
    "tpu.trace_start"() <{level = 10 : i32, message = "td,sd->ts"}> : () -> ()
    %cst_28 = arith.constant dense<0.000000e+00> : vector<8x8xf32>
    %54 = tpu.matmul %51, %52, %cst_28 {dimension_numbers = #tpu.dot_dimension_numbers<[1], [1], [0], [0], [0, 0, 1, 0], [], []>} : vector<8x8xbf16>, vector<8x8xbf16>, vector<8x8xf32> -> vector<8x8xf32>
    "tpu.trace_stop"() : () -> ()
    %55 = arith.addf %54, %14 : vector<8x8xf32>
    %cst_29 = arith.constant dense<0xFF800000> : vector<8xf32>
    %56 = vector.multi_reduction <maximumf>, %55, %cst_29 [1] : vector<8x8xf32> to vector<8xf32>
    %57 = vector.shape_cast %56 : vector<8xf32> to vector<8x1xf32>
    %58 = vector.broadcast %57 : vector<8x1xf32> to vector<8x8xf32>
    %59 = arith.subf %55, %58 : vector<8x8xf32>
    %60 = math.exp %59 : vector<8x8xf32>
    %cst_30 = arith.constant dense<0.000000e+00> : vector<8xf32>
    %61 = vector.multi_reduction <add>, %60, %cst_30 [1] : vector<8x8xf32> to vector<8xf32>
    %62 = vector.shape_cast %61 : vector<8xf32> to vector<8x1xf32>
    %63 = arith.truncf %60 : vector<8x8xf32> to vector<8x8xbf16>
    %cst_31 = arith.constant dense<0.000000e+00> : vector<8x8xf32>
    %64 = tpu.matmul %63, %53, %cst_31 {dimension_numbers = #tpu.dot_dimension_numbers<[1], [0], [0], [1], [0, 0, 1, 1], [], []>} : vector<8x8xbf16>, vector<8x8xbf16>, vector<8x8xf32> -> vector<8x8xf32>
    %65 = tpu.reciprocal %62 {approx = true} : vector<8x1xf32> -> vector<8x1xf32>
    %66 = vector.broadcast %65 : vector<8x1xf32> to vector<8x8xf32>
    %67 = arith.mulf %64, %66 : vector<8x8xf32>
    %68 = arith.truncf %67 : vector<8x8xf32> to vector<8x8xbf16>
    %c0_32 = arith.constant 0 : index
    %c24 = arith.constant 24 : index
    %69 = vector.load %arg7[%c0_32, %c24] : memref<8x96xbf16, #tpu.memory_space<vmem>>, vector<8x8xbf16>
    %c0_33 = arith.constant 0 : index
    %c56 = arith.constant 56 : index
    %70 = vector.load %arg7[%c0_33, %c56] : memref<8x96xbf16, #tpu.memory_space<vmem>>, vector<8x8xbf16>
    %c0_34 = arith.constant 0 : index
    %c88 = arith.constant 88 : index
    %71 = vector.load %arg7[%c0_34, %c88] : memref<8x96xbf16, #tpu.memory_space<vmem>>, vector<8x8xbf16>
    "tpu.trace_start"() <{level = 10 : i32, message = "td,sd->ts"}> : () -> ()
    %cst_35 = arith.constant dense<0.000000e+00> : vector<8x8xf32>
    %72 = tpu.matmul %69, %70, %cst_35 {dimension_numbers = #tpu.dot_dimension_numbers<[1], [1], [0], [0], [0, 0, 1, 0], [], []>} : vector<8x8xbf16>, vector<8x8xbf16>, vector<8x8xf32> -> vector<8x8xf32>
    "tpu.trace_stop"() : () -> ()
    %73 = arith.addf %72, %14 : vector<8x8xf32>
    %cst_36 = arith.constant dense<0xFF800000> : vector<8xf32>
    %74 = vector.multi_reduction <maximumf>, %73, %cst_36 [1] : vector<8x8xf32> to vector<8xf32>
    %75 = vector.shape_cast %74 : vector<8xf32> to vector<8x1xf32>
    %76 = vector.broadcast %75 : vector<8x1xf32> to vector<8x8xf32>
    %77 = arith.subf %73, %76 : vector<8x8xf32>
    %78 = math.exp %77 : vector<8x8xf32>
    %cst_37 = arith.constant dense<0.000000e+00> : vector<8xf32>
    %79 = vector.multi_reduction <add>, %78, %cst_37 [1] : vector<8x8xf32> to vector<8xf32>
    %80 = vector.shape_cast %79 : vector<8xf32> to vector<8x1xf32>
    %81 = arith.truncf %78 : vector<8x8xf32> to vector<8x8xbf16>
    %cst_38 = arith.constant dense<0.000000e+00> : vector<8x8xf32>
    %82 = tpu.matmul %81, %71, %cst_38 {dimension_numbers = #tpu.dot_dimension_numbers<[1], [0], [0], [1], [0, 0, 1, 1], [], []>} : vector<8x8xbf16>, vector<8x8xbf16>, vector<8x8xf32> -> vector<8x8xf32>
    %83 = tpu.reciprocal %80 {approx = true} : vector<8x1xf32> -> vector<8x1xf32>
    %84 = vector.broadcast %83 : vector<8x1xf32> to vector<8x8xf32>
    %85 = arith.mulf %82, %84 : vector<8x8xf32>
    %86 = arith.truncf %85 : vector<8x8xf32> to vector<8x8xbf16>
    %87 = tpu.concatenate %32, %50, %68, %86 in 1 : vector<8x8xbf16>, vector<8x8xbf16>, vector<8x8xbf16>, vector<8x8xbf16> -> vector<8x32xbf16>
    %c0_39 = arith.constant 0 : index
    %c0_40 = arith.constant 0 : index
    %88 = vector.load %arg8[%c0_39, %c0_40] : memref<8x32xbf16, #tpu.memory_space<vmem>>, vector<8x32xbf16>
    tpu.vector_store %arg8[%c0_39, %c0_40], %87 {strides = array<i32>} : memref<8x32xbf16, #tpu.memory_space<vmem>>, vector<8x32xbf16>,
    %c0_41 = arith.constant 0 : index
    %c0_42 = arith.constant 0 : index
    %89 = vector.load %arg8[%c0_41, %c0_42] : memref<8x32xbf16, #tpu.memory_space<vmem>>, vector<8x32xbf16>
    %c0_43 = arith.constant 0 : index
    %c0_44 = arith.constant 0 : index
    %90 = vector.load %arg4[%c0_43, %c0_44] : memref<32x32xbf16, #tpu.memory_space<vmem>>, vector<32x32xbf16>
    %cst_45 = arith.constant dense<0.000000e+00> : vector<8x32xf32>
    %91 = tpu.matmul %89, %90, %cst_45 {dimension_numbers = #tpu.dot_dimension_numbers<[1], [0], [0], [1], [0, 0, 1, 1], [], []>} : vector<8x32xbf16>, vector<32x32xbf16>, vector<8x32xf32> -> vector<8x32xf32>
    %c0_46 = arith.constant 0 : index
    %c0_47 = arith.constant 0 : index
    %92 = vector.load %arg5[%c0_46, %c0_47] : memref<1x32xf32, #tpu.memory_space<vmem>>, vector<1x32xf32>
    %93 = vector.broadcast %92 : vector<1x32xf32> to vector<8x32xf32>
    %94 = arith.addf %91, %93 : vector<8x32xf32>
    %c0_48 = arith.constant 0 : index
    %c0_49 = arith.constant 0 : index
    %c0_50 = arith.constant 0 : index
    %95 = vector.load %arg6[%c0_48, %c0_49, %c0_50] : memref<1x8x32xf32, #tpu.memory_space<vmem>>, vector<1x8x32xf32>
    %96 = vector.shape_cast %95 : vector<1x8x32xf32> to vector<8x32xf32>
    %97 = vector.shape_cast %94 : vector<8x32xf32> to vector<1x8x32xf32>
    tpu.vector_store %arg6[%c0_48, %c0_49, %c0_50], %97 {strides = array<i32>} : memref<1x8x32xf32, #tpu.memory_space<vmem>>, vector<1x8x32xf32>,
    return
  }
  func.func @transform_0(%arg0: i32) -> (i32, i32, i32) {
    %c0_i32 = arith.constant 0 : i32
    %c0_i32_0 = arith.constant 0 : i32
    %c0_i32_1 = arith.constant 0 : i32
    return %arg0, %c0_i32, %c0_i32_0 : i32, i32, i32
  }
  func.func @transform_1(%arg0: i32) -> (i32, i32) {
    %c0_i32 = arith.constant 0 : i32
    %c0_i32_0 = arith.constant 0 : i32
    %c0_i32_1 = arith.constant 0 : i32
    return %c0_i32, %c0_i32_0 : i32, i32
  }
  func.func @transform_2(%arg0: i32) -> (i32, i32) {
    %c0_i32 = arith.constant 0 : i32
    %c0_i32_0 = arith.constant 0 : i32
    %c0_i32_1 = arith.constant 0 : i32
    return %c0_i32, %c0_i32_0 : i32, i32
  }
  func.func @transform_3(%arg0: i32) -> (i32, i32) {
    %c0_i32 = arith.constant 0 : i32
    %c0_i32_0 = arith.constant 0 : i32
    %c0_i32_1 = arith.constant 0 : i32
    return %c0_i32, %c0_i32_0 : i32, i32
  }
  func.func @transform_4(%arg0: i32) -> (i32, i32) {
    %c0_i32 = arith.constant 0 : i32
    %c0_i32_0 = arith.constant 0 : i32
    %c0_i32_1 = arith.constant 0 : i32
    return %c0_i32, %c0_i32_0 : i32, i32
  }
  func.func @transform_5(%arg0: i32) -> (i32, i32, i32) {
    %c0_i32 = arith.constant 0 : i32
    %c0_i32_0 = arith.constant 0 : i32
    %c0_i32_1 = arith.constant 0 : i32
    return %arg0, %c0_i32, %c0_i32_0 : i32, i32, i32
  }
}

</mosaic_0001>

<llo_original>
// kernel: tpu_custom_call.1
$region0: #{tpu_custom_call.1}
  #allocation0 [shape = 'u32[]', space=smem, size = 0x4, offset = 0x4, fixed_abs, tag = 'smem constant byte address 0x4 - core index']
  #allocation1 [shape = 'u32[144,128]{1,0:T(1,128)}', space=vmem, size = 0x12000, scoped, tag = 'internal scratch']
  #allocation2 [shape = 'bf16[8,96]{1,0:T(8,128)(2,1)}', space=vmem, size = 0x800, scoped, tag = 'scratch operand']
  #allocation3 [shape = 'bf16[8,32]{1,0:T(8,128)(2,1)}', space=vmem, size = 0x800, scoped, tag = 'scratch operand']
  %s0 = inlined_call_operand.hbm [shape: bf16[2,8,32], index: 0, kind: input, shape index: {}]
  %s1 = inlined_call_operand.hbm [shape: bf16[32,96], index: 1, kind: input, shape index: {}]
  %s2 = inlined_call_operand.vmem [shape: f32[1,96], index: 2, kind: input, shape index: {}]
  %s3 = inlined_call_operand.hbm [shape: bf16[32,32], index: 3, kind: input, shape index: {}]
  %s4 = inlined_call_operand.vmem [shape: f32[1,32], index: 4, kind: input, shape index: {}]
  %s5 = inlined_call_operand.hbm [shape: f32[2,8,32], index: 5, kind: output, shape index: {}]
  %s6 = sld [smem:[#allocation0]]
  $region65: #{tpu_custom_call.1} parent=0
    _
  %s8 = ssub.s32 1, %s6
  %s9 = scalar_select 0, %s8, %s6
  $region1: #{tpu_custom_call.1} parent=0
    #allocation4 [shape = 'u8[4096]{0}', space=vmem, size = 0x1000, scoped, tag = 'input window, operand 0']
    #allocation5 [shape = 's32[2]{0}', space=sflag, size = 0x8, scoped, tag = 'scoped memory for tpu_custom_call.1']
    #allocation6 [shape = 's32[2]{0}', space=sflag, size = 0x8, scoped, tag = 'scoped memory for tpu_custom_call.1']
    #allocation7 [shape = 'u8[8192]{0}', space=vmem, size = 0x2000, scoped, tag = 'input window, operand 1, single buffered']
    #allocation8 [shape = 's32[1]{0}', space=sflag, size = 0x4, scoped, tag = 'scoped memory for tpu_custom_call.1']
    #allocation9 [shape = 'u8[8192]{0}', space=vmem, size = 0x2000, scoped, tag = 'input window, operand 3, single buffered']
    #allocation10 [shape = 'u8[8192]{0}', space=vmem, size = 0x2000, scoped, tag = 'output window, operand 0']
    %10 = vsyncpa [#allocation5], 0
    %s11 = scalar_lea.sflag [#allocation5], 1
    %12 = vsyncpa %s11, 0
    %13 = vsyncpa [#allocation8], 0
    %14 = vsyncpa [#allocation6], 0
    %s15 = scalar_lea.sflag [#allocation6], 1
    %16 = vsyncpa %s15, 0
    loop: start=0, step=1, limit=4
    $region2: #{tpu_custom_call.1} parent=1 // loop_pre_header
      _
    $region3: #{tpu_custom_call.1} parent=1 // loop_header
      %s18 = sphi 0, %s22
      %p19 = scmp.ge.s32.totalorder %s18, 4
      %s28 = sphi 0, %s30
      %s31 = sphi 0, %s28
      %s32 = sphi 0, %s31
      %s48 = sphi 0, %s32
      %s52 = sphi 0, %s52
      %s54 = sphi 0, %s52
      %s55 = sphi 0, %s54
      %s69 = sphi 0, %s55
      %s73 = sphi 0, %s73
      %s75 = sphi 0, %s73
      %s76 = sphi 0, %s75
      %s90 = sphi 0, %s76
      %s94 = sphi 0, %s94
      %s96 = sphi 0, %s94
      %s97 = sphi 0, %s96
      %s111 = sphi 0, %s97
      %s115 = sphi 0, %s115
      %s117 = sphi 0, %s115
      %s118 = sphi 0, %s117
      %s132 = sphi 0, %s118
      %s138 = sphi 0, %s140
      %s141 = sphi 0, %s138
      %s142 = sphi 0, %s141
      %s158 = sphi 0, %s142
    $region4: #{tpu_custom_call.1} parent=1 // loop_header_branch
      %21 = sbr.rel (%p19) target = $region8
    $region5: #{tpu_custom_call.1} parent=1 // loop_body
      %s23 = ssub.s32 %s18, 1
      %s24 = ssub.s32 %s18, 2
      %s25 = sadd.s32 %s18, 1
      %s26 = ssub.s32 %s18, %s25
      %p27 = scmp.eq.s32.totalorder %s26, 0
      %s29 = sadd.s32 %s28, 1
      %s30 = scalar_select %p27, %s28, %s29
      %p33 = pneg %p27
      %p34 = scmp.eq.s32.totalorder %s18, 1
      %p35 = por %p33, %p34
      %p36 = scmp.ne.s32.totalorder %s28, %s31
      %p37 = scmp.eq.s32.totalorder %s18, 0
      %p38 = por %p36, %p37
      %p39 = scmp.ne.s32.totalorder %s28, %s31
      %p40 = scmp.eq.s32.totalorder %s23, 1
      %p41 = por %p39, %p40
      %p42 = scmp.ne.s32.totalorder %s31, %s32
      %p43 = scmp.eq.s32.totalorder %s23, 0
      %p44 = por %p42, %p43
      %p45 = scmp.ne.s32.totalorder %s31, %s32
      %p46 = scmp.eq.s32.totalorder %s24, 1
      %p47 = por %p45, %p46
      %p49 = scmp.ne.s32.totalorder %s32, %s48
      %p50 = scmp.eq.s32.totalorder %s24, 0
      %p51 = por %p49, %p50
      %s53 = sadd.s32 %s52, 1
      %p56 = scmp.eq.s32.totalorder %s18, 1
      %p57 = scmp.ne.s32.totalorder %s52, %s54
      %p58 = scmp.eq.s32.totalorder %s18, 0
      %p59 = por %p57, %p58
      %p60 = scmp.ne.s32.totalorder %s52, %s54
      %p61 = scmp.eq.s32.totalorder %s23, 1
      %p62 = por %p60, %p61
      %p63 = scmp.ne.s32.totalorder %s54, %s55
      %p64 = scmp.eq.s32.totalorder %s23, 0
      %p65 = por %p63, %p64
      %p66 = scmp.ne.s32.totalorder %s54, %s55
      %p67 = scmp.eq.s32.totalorder %s24, 1
      %p68 = por %p66, %p67
      %p70 = scmp.ne.s32.totalorder %s55, %s69
      %p71 = scmp.eq.s32.totalorder %s24, 0
      %p72 = por %p70, %p71
      %s74 = sadd.s32 %s73, 1
      %p77 = scmp.eq.s32.totalorder %s18, 1
      %p78 = scmp.ne.s32.totalorder %s73, %s75
      %p79 = scmp.eq.s32.totalorder %s18, 0
      %p80 = por %p78, %p79
      %p81 = scmp.ne.s32.totalorder %s73, %s75
      %p82 = scmp.eq.s32.totalorder %s23, 1
      %p83 = por %p81, %p82
      %p84 = scmp.ne.s32.totalorder %s75, %s76
      %p85 = scmp.eq.s32.totalorder %s23, 0
      %p86 = por %p84, %p85
      %p87 = scmp.ne.s32.totalorder %s75, %s76
      %p88 = scmp.eq.s32.totalorder %s24, 1
      %p89 = por %p87, %p88
      %p91 = scmp.ne.s32.totalorder %s76, %s90
      %p92 = scmp.eq.s32.totalorder %s24, 0
      %p93 = por %p91, %p92
      %s95 = sadd.s32 %s94, 1
      %p98 = scmp.eq.s32.totalorder %s18, 1
      %p99 = scmp.ne.s32.totalorder %s94, %s96
      %p100 = scmp.eq.s32.totalorder %s18, 0
      %p101 = por %p99, %p100
      %p102 = scmp.ne.s32.totalorder %s94, %s96
      %p103 = scmp.eq.s32.totalorder %s23, 1
      %p104 = por %p102, %p103
      %p105 = scmp.ne.s32.totalorder %s96, %s97
      %p106 = scmp.eq.s32.totalorder %s23, 0
      %p107 = por %p105, %p106
      %p108 = scmp.ne.s32.totalorder %s96, %s97
      %p109 = scmp.eq.s32.totalorder %s24, 1
      %p110 = por %p108, %p109
      %p112 = scmp.ne.s32.totalorder %s97, %s111
      %p113 = scmp.eq.s32.totalorder %s24, 0
      %p114 = por %p112, %p113
      %s116 = sadd.s32 %s115, 1
      %p119 = scmp.eq.s32.totalorder %s18, 1
      %p120 = scmp.ne.s32.totalorder %s115, %s117
      %p121 = scmp.eq.s32.totalorder %s18, 0
      %p122 = por %p120, %p121
      %p123 = scmp.ne.s32.totalorder %s115, %s117
      %p124 = scmp.eq.s32.totalorder %s23, 1
      %p125 = por %p123, %p124
      %p126 = scmp.ne.s32.totalorder %s117, %s118
      %p127 = scmp.eq.s32.totalorder %s23, 0
      %p128 = por %p126, %p127
      %p129 = scmp.ne.s32.totalorder %s117, %s118
      %p130 = scmp.eq.s32.totalorder %s24, 1
      %p131 = por %p129, %p130
      %p133 = scmp.ne.s32.totalorder %s118, %s132
      %p134 = scmp.eq.s32.totalorder %s24, 0
      %p135 = por %p133, %p134
      %s136 = ssub.s32 %s18, %s25
      %p137 = scmp.eq.s32.totalorder %s136, 0
      %s139 = sadd.s32 %s138, 1
      %s140 = scalar_select %p137, %s138, %s139
      %p143 = pneg %p137
      %p144 = scmp.eq.s32.totalorder %s18, 1
      %p145 = por %p143, %p144
      %p146 = scmp.ne.s32.totalorder %s138, %s141
      %p147 = scmp.eq.s32.totalorder %s18, 0
      %p148 = por %p146, %p147
      %p149 = scmp.ne.s32.totalorder %s138, %s141
      %p150 = scmp.eq.s32.totalorder %s23, 1
      %p151 = por %p149, %p150
      %p152 = scmp.ne.s32.totalorder %s141, %s142
      %p153 = scmp.eq.s32.totalorder %s23, 0
      %p154 = por %p152, %p153
      %p155 = scmp.ne.s32.totalorder %s141, %s142
      %p156 = scmp.eq.s32.totalorder %s24, 1
      %p157 = por %p155, %p156
      %p159 = scmp.ne.s32.totalorder %s142, %s158
      %p160 = scmp.eq.s32.totalorder %s24, 0
      %p161 = por %p159, %p160
      %p162 = scmp.le.s32.totalorder 1, %s18
      %p163 = scmp.lt.s32.totalorder %s18, 3
      %p164 = pnand %p162, %p163
      %p165 = pneg %p164
      // Predicated region
      $region9: #{tpu_custom_call.1} parent=5 // pred_check
        _
      $region10: #{tpu_custom_call.1} parent=5 // pred_check_branch
        %167 = sbr.rel (%p164) target = $region12
      $region11: #{tpu_custom_call.1} parent=5 // pred_region
        %s168 = ssub.s32 %s18, 1
        // Predicated region
        $region13: #{tpu_custom_call.1} parent=11 // pred_check
          %p169 = pneg %p65
        $region14: #{tpu_custom_call.1} parent=11 // pred_check_branch
          %171 = sbr.rel (%p169) target = $region16
        $region15: #{tpu_custom_call.1} parent=11 // pred_region
          %s173 = ssub.s32 256, 256
          %174 = vsyncadd [#allocation8], %s173
          %s175 = sshll.u32 [#allocation7], 4
          %s176 = int_to_ptr.vmem [resolvable:$true] %s175
          %181 = dma.hbm_to_vmem [thread:$0]  %s1, 256, %s176, [#allocation8], 64, 64, 4
        $region16: #{tpu_custom_call.1} parent=11 // pred_fallthru
          _
        // Predicated region
        $region17: #{tpu_custom_call.1} parent=11 // pred_check
          %p182 = pneg %p86
        $region18: #{tpu_custom_call.1} parent=11 // pred_check_branch
          %184 = sbr.rel (%p182) target = $region20
        $region19: #{tpu_custom_call.1} parent=11 // pred_region
          _
        $region20: #{tpu_custom_call.1} parent=11 // pred_fallthru
          _
        // Predicated region
        $region21: #{tpu_custom_call.1} parent=11 // pred_check
          %p185 = pneg %p107
        $region22: #{tpu_custom_call.1} parent=11 // pred_check_branch
          %187 = sbr.rel (%p185) target = $region24
        $region23: #{tpu_custom_call.1} parent=11 // pred_region
          %s189 = ssub.s32 256, 256
          %190 = vsyncadd [#allocation8], %s189
          %s191 = sshll.u32 [#allocation9], 4
          %s192 = int_to_ptr.vmem [resolvable:$true] %s191
          %197 = dma.hbm_to_vmem [thread:$0]  %s3, 256, %s192, [#allocation8], 64, 64, 4
        $region24: #{tpu_custom_call.1} parent=11 // pred_fallthru
          _
        // Predicated region
        $region25: #{tpu_custom_call.1} parent=11 // pred_check
          %p198 = pneg %p128
        $region26: #{tpu_custom_call.1} parent=11 // pred_check_branch
          %200 = sbr.rel (%p198) target = $region28
        $region27: #{tpu_custom_call.1} parent=11 // pred_region
          _
        $region28: #{tpu_custom_call.1} parent=11 // pred_fallthru
          _
      $region12: #{tpu_custom_call.1} parent=5 // pred_fallthru
        _
      %p201 = scmp.lt.s32.totalorder %s18, 2
      // Predicated region
      $region29: #{tpu_custom_call.1} parent=5 // pred_check
        %p202 = pneg %p201
      $region30: #{tpu_custom_call.1} parent=5 // pred_check_branch
        %204 = sbr.rel (%p202) target = $region32
      $region31: #{tpu_custom_call.1} parent=5 // pred_region
        // Predicated region
        $region33: #{tpu_custom_call.1} parent=31 // pred_check
          %p205 = pneg %p38
        $region34: #{tpu_custom_call.1} parent=31 // pred_check_branch
          %207 = sbr.rel (%p205) target = $region36
        $region35: #{tpu_custom_call.1} parent=31 // pred_region
          %s208 = sand.u32 %s28, 1
          %s209 = scalar_lea.sflag [#allocation5], %s208
          %s210 = sand.u32 %s28, 1
          %s211 = smul.addr %s210, 4
          %s212 = scalar_lea.vmem [#allocation4], %s211
          %s214 = ssub.s32 64, 64
          %215 = vsyncadd %s209, %s214
          %s216 = smul.addr %s18, 64
          %s217 = scalar_lea.hbm %s0, %s216
          %s219 = sshll.u32 %s212, 4
          %s220 = int_to_ptr.vmem [resolvable:$true] %s219
          %222 = dma.hbm_to_vmem [thread:$0]  %s217, 64, %s220, %s209
        $region36: #{tpu_custom_call.1} parent=31 // pred_fallthru
          _
      $region32: #{tpu_custom_call.1} parent=5 // pred_fallthru
        _
      %p223 = scmp.le.s32.totalorder 1, %s18
      %p224 = scmp.lt.s32.totalorder %s18, 3
      %p225 = pnand %p223, %p224
      %p226 = pneg %p225
      // Predicated region
      $region37: #{tpu_custom_call.1} parent=5 // pred_check
        _
      $region38: #{tpu_custom_call.1} parent=5 // pred_check_branch
        %228 = sbr.rel (%p225) target = $region40
      $region39: #{tpu_custom_call.1} parent=5 // pred_region
        %s229 = ssub.s32 %s18, 1
        %s230 = sand.u32 %s31, 1
        %s231 = scalar_lea.sflag [#allocation5], %s230
        %s232 = sand.u32 %s31, 1
        %s233 = smul.addr %s232, 4
        %s234 = scalar_lea.vmem [#allocation4], %s233
        // Predicated region
        $region41: #{tpu_custom_call.1} parent=39 // pred_check
          %p235 = pneg %p44
        $region42: #{tpu_custom_call.1} parent=39 // pred_check_branch
          %237 = sbr.rel (%p235) target = $region44
        $region43: #{tpu_custom_call.1} parent=39 // pred_region
          %238 = dma.done %s231, 64
        $region44: #{tpu_custom_call.1} parent=39 // pred_fallthru
          _
        // Predicated region
        $region45: #{tpu_custom_call.1} parent=39 // pred_check
          %p239 = pneg %p65
        $region46: #{tpu_custom_call.1} parent=39 // pred_check_branch
          %241 = sbr.rel (%p239) target = $region48
        $region47: #{tpu_custom_call.1} parent=39 // pred_region
          %242 = dma.done [#allocation8], 256
        $region48: #{tpu_custom_call.1} parent=39 // pred_fallthru
          _
        // Predicated region
        $region49: #{tpu_custom_call.1} parent=39 // pred_check
          %p243 = pneg %p107
        $region50: #{tpu_custom_call.1} parent=39 // pred_check_branch
          %245 = sbr.rel (%p243) target = $region52
        $region51: #{tpu_custom_call.1} parent=39 // pred_region
          %246 = dma.done [#allocation8], 256
        $region52: #{tpu_custom_call.1} parent=39 // pred_fallthru
          _
        %s247 = sand.u32 %s31, 1
        %s248 = scalar_lea.sflag [#allocation5], %s247
        %s249 = sand.u32 %s31, 1
        %s250 = smul.addr %s249, 4
        %s251 = scalar_lea.vmem [#allocation4], %s250
        %p252 = pneg %p44
        %p253 = pneg %p41
        %p254 = pneg %p65
        %p255 = pneg %p62
        %p256 = pneg %p86
        %p257 = pneg %p83
        %p258 = pneg %p107
        %p259 = pneg %p104
        %p260 = pneg %p128
        %p261 = pneg %p125
        %p262 = pneg %p154
        %p263 = pneg %p151
        %s264 = sand.u32 %s141, 1
        %s265 = scalar_lea.sflag [#allocation6], %s264
        %s266 = sand.u32 %s141, 1
        %s267 = smul.addr %s266, 8
        %s268 = scalar_lea.vmem [#allocation10], %s267
        %v270 = vld [vmem:[%s234] sm:$0xf]
        %v271 = vld [vmem:[#allocation7] sm:$0xf]
        %v272 = vld [vmem:[#allocation7 + $0x4] sm:$0xf]
        %v273 = vld [vmem:[#allocation7 + $0x8] sm:$0xf]
        %v274 = vld [vmem:[#allocation7 + $0xc] sm:$0xf]
        %v275 = vld [vmem:[%s2] sm:$0x1]
        %v277 = vlaneseq
        %v278 = vshrl.u32 %v277, 7
        %v279 = vsub.s32 0, %v278
        %v280 = vrot.slane %v275, %v279
        %v286 = vunpack.c.l.b16 %v271
        %v287 = vunpack.c.l.b16 %v272
        %v288 = vunpack.c.l.b16 %v273
        %v289 = vunpack.c.l.b16 %v274
        %v290 = vpack.c.b16 %v287, %v286
        %v291 = vpack.c.b16 %v289, %v288
        %vm294 = vcmask 261120
        %v296 = vsel %vm294, %v270, 0
        %298 = vmatprep.subr.bf16.mxu0 0
        %299 = vmatpush1.bf16.msra.mxu0 %v290
        %300 = vmatprep.subr.bf16.mxu0 0
        %301 = vmatpush1.bf16.msra.mxu0 %v291
        %302 = vmatprep.subr.bf16.mxu0 0
        %303 = vmatpush1.bf16.msra.mxu0 0
        %304 = vmatprep.subr.bf16.mxu0 0
        %305 = vmatpush1.bf16.msra.mxu0 0
        %306 = vmatprep.subr.bf16.mxu0 0
        %307 = vmatpush1.bf16.msra.mxu0 0
        %308 = vmatprep.subr.bf16.mxu0 0
        %309 = vmatpush1.bf16.msra.mxu0 0
        %310 = vmatprep.subr.bf16.mxu0 0
        %311 = vmatpush1.bf16.msra.mxu0 0
        %312 = vmatprep.subr.bf16.mxu0 0
        %313 = vmatpush1.bf16.msra.mxu0 0
        %314 = vmatprep.subr.bf16.mxu0 0
        %315 = vmatpush1.bf16.msra.mxu0 0
        %316 = vmatprep.subr.bf16.mxu0 0
        %317 = vmatpush1.bf16.msra.mxu0 0
        %318 = vmatprep.subr.bf16.mxu0 0
        %319 = vmatpush1.bf16.msra.mxu0 0
        %320 = vmatprep.subr.bf16.mxu0 0
        %321 = vmatpush1.bf16.msra.mxu0 0
        %322 = vmatprep.subr.bf16.mxu0 0
        %323 = vmatpush1.bf16.msra.mxu0 0
        %324 = vmatprep.subr.bf16.mxu0 0
        %325 = vmatpush1.bf16.msra.mxu0 0
        %326 = vmatprep.subr.bf16.mxu0 0
        %327 = vmatpush1.bf16.msra.mxu0 0
        %328 = vmatprep.subr.bf16.mxu0 0
        %329 = vmatpush1.bf16.msra.mxu0 0
        %330 = vmatprep.mubr.bf16.mxu0 0
        %331 = vmatmul.mubr.bf16.gmra.mrb[0].mxu0 %v296
        %v332 = vpop.f32.mrb[0].mxu0
        %v333 = vadd.f32 %v280, %v332
        %v334 = vpop.f32.mrb[0].mxu0
        %v335 = vpop.f32.mrb[0].mxu0
        %v336 = vpop.f32.mrb[0].mxu0
        %337 = vdwg.mxu0
        %v338 = vpack.c.bf16 %v333, %v333
        %vm339 = vcmask 781312
        %340 = vst.msk [vmem:[#allocation2] sm:$0xf] %vm339, %v338
        %v341 = vlaneseq
        %v342 = vshrl.u32 %v341, 7
        %v343 = vlaneseq
        %v344 = vand.u32 %v343, 127
        %vm345 = vcmp.ge.s32.totalorder %v342, %v344
        %v346 = vsel %vm345, 0.0, -1e+30
        %v347 = vld [vmem:[#allocation2] sm:$0xf]
        %v349 = vunpack.c.l.b16 %v347
        %v350 = vpack.c.b16 %v349, %v349
        %351 = vrot.lane.b32.xlu0 %v350, 96
        %v352 = vpop.permute.xlu0 %351
        %vm353 = vcmask 64512
        %v355 = vsel %vm353, %v347, 0
        %v358 = vsel %vm353, %v352, 0
        %360 = vmatprep.subr.bf16.mxu0 0
        %361 = vmatpush1.bf16.xpose.msra.mxu0 %v358
        %362 = vmatprep.subr.bf16.mxu0 0
        %363 = vmatpush1.bf16.xpose.msra.mxu0 0
        %364 = vmatprep.subr.bf16.mxu0 0
        %365 = vmatpush1.bf16.xpose.msra.mxu0 0
        %366 = vmatprep.subr.bf16.mxu0 0
        %367 = vmatpush1.bf16.xpose.msra.mxu0 0
        %368 = vmatprep.subr.bf16.mxu0 0
        %369 = vmatpush1.bf16.xpose.msra.mxu0 0
        %370 = vmatprep.subr.bf16.mxu0 0
        %371 = vmatpush1.bf16.xpose.msra.mxu0 0
        %372 = vmatprep.subr.bf16.mxu0 0
        %373 = vmatpush1.bf16.xpose.msra.mxu0 0
        %374 = vmatprep.subr.bf16.mxu0 0
        %375 = vmatpush1.bf16.xpose.msra.mxu0 0
        %376 = vmatprep.subr.bf16.mxu0 0
        %377 = vmatpush1.bf16.xpose.msra.mxu0 0
        %378 = vmatprep.subr.bf16.mxu0 0
        %379 = vmatpush1.bf16.xpose.msra.mxu0 0
        %380 = vmatprep.subr.bf16.mxu0 0
        %381 = vmatpush1.bf16.xpose.msra.mxu0 0
        %382 = vmatprep.subr.bf16.mxu0 0
        %383 = vmatpush1.bf16.xpose.msra.mxu0 0
        %384 = vmatprep.subr.bf16.mxu0 0
        %385 = vmatpush1.bf16.xpose.msra.mxu0 0
        %386 = vmatprep.subr.bf16.mxu0 0
        %387 = vmatpush1.bf16.xpose.msra.mxu0 0
        %388 = vmatprep.subr.bf16.mxu0 0
        %389 = vmatpush1.bf16.xpose.msra.mxu0 0
        %390 = vmatprep.subr.bf16.mxu0 0
        %391 = vmatpush1.bf16.xpose.msra.mxu0 0
        %392 = vmatprep.mubr.bf16.mxu0 0
        %393 = vmatmul.mubr.bf16.gmra.mrb[0].mxu0 %v355
        %v394 = vpop.f32.mrb[0].mxu0
        %v395 = vadd.f32 %v346, %v394
        %v396 = vpop.f32.mrb[0].mxu0
        %v397 = vpop.f32.mrb[0].mxu0
        %v398 = vpop.f32.mrb[0].mxu0
        %399 = vdwg.mxu0
        %v400 = vsel %vm353, %v395, -inf
        %401 = vmax.xlane.f32.xlu0 %v400
        %v402 = vpop.xlane.xlu0 %401
        %v403 = vsub.f32 %v395, %v402
        %v404 = vmul.f32 %v403, 1.442695
        %v405 = vpow.pop %v404
        %v406 = vsel %vm353, %v405, 0.0
        %407 = vadd.xlane.f32.xlu0 %v406
        %v408 = vpop.xlane.xlu0 %407
        %v409 = vpack.c.bf16 %v405, %v405
        %410 = vrot.lane.b32.xlu0 %v350, 64
        %v411 = vpop.permute.xlu0 %410
        %v413 = vsel %vm353, %v409, 0
        %vm415 = vcmask 1043456
        %v417 = vsel %vm415, %v411, 0
        %419 = vmatprep.subr.bf16.mxu0 0
        %420 = vmatpush1.bf16.msra.mxu0 %v417
        %421 = vmatprep.subr.bf16.mxu0 0
        %422 = vmatpush1.bf16.msra.mxu0 0
        %423 = vmatprep.subr.bf16.mxu0 0
        %424 = vmatpush1.bf16.msra.mxu0 0
        %425 = vmatprep.subr.bf16.mxu0 0
        %426 = vmatpush1.bf16.msra.mxu0 0
        %427 = vmatprep.subr.bf16.mxu0 0
        %428 = vmatpush1.bf16.msra.mxu0 0
        %429 = vmatprep.subr.bf16.mxu0 0
        %430 = vmatpush1.bf16.msra.mxu0 0
        %431 = vmatprep.subr.bf16.mxu0 0
        %432 = vmatpush1.bf16.msra.mxu0 0
        %433 = vmatprep.subr.bf16.mxu0 0
        %434 = vmatpush1.bf16.msra.mxu0 0
        %435 = vmatprep.subr.bf16.mxu0 0
        %436 = vmatpush1.bf16.msra.mxu0 0
        %437 = vmatprep.subr.bf16.mxu0 0
        %438 = vmatpush1.bf16.msra.mxu0 0
        %439 = vmatprep.subr.bf16.mxu0 0
        %440 = vmatpush1.bf16.msra.mxu0 0
        %441 = vmatprep.subr.bf16.mxu0 0
        %442 = vmatpush1.bf16.msra.mxu0 0
        %443 = vmatprep.subr.bf16.mxu0 0
        %444 = vmatpush1.bf16.msra.mxu0 0
        %445 = vmatprep.subr.bf16.mxu0 0
        %446 = vmatpush1.bf16.msra.mxu0 0
        %447 = vmatprep.subr.bf16.mxu0 0
        %448 = vmatpush1.bf16.msra.mxu0 0
        %449 = vmatprep.subr.bf16.mxu0 0
        %450 = vmatpush1.bf16.msra.mxu0 0
        %451 = vmatprep.mubr.bf16.mxu0 0
        %452 = vmatmul.mubr.bf16.gmra.mrb[0].mxu0 %v413
        %v453 = vpop.f32.mrb[0].mxu0
        %v454 = vadd.f32 0.0, %v453
        %v455 = vpop.f32.mrb[0].mxu0
        %v456 = vpop.f32.mrb[0].mxu0
        %v457 = vpop.f32.mrb[0].mxu0
        %458 = vdwg.mxu0
        %v459 = vrcp.pop %v408
        %v460 = vmul.f32 %v454, %v459
        %v461 = vpack.c.bf16 %v460, %v460
        %v462 = vld [vmem:[#allocation2] sm:$0xf]
        %v464 = vunpack.c.l.b16 %v462
        %v465 = vpack.c.b16 %v464, %v464
        %466 = vrot.lane.b32.xlu0 %v465, 120
        %v467 = vpop.permute.xlu0 %466
        %468 = vrot.lane.b32.xlu0 %v465, 88
        %v469 = vpop.permute.xlu0 %468
        %v471 = vsel %vm353, %v467, 0
        %v474 = vsel %vm353, %v469, 0
        %476 = vmatprep.subr.bf16.mxu0 0
        %477 = vmatpush1.bf16.xpose.msra.mxu0 %v474
        %478 = vmatprep.subr.bf16.mxu0 0
        %479 = vmatpush1.bf16.xpose.msra.mxu0 0
        %480 = vmatprep.subr.bf16.mxu0 0
        %481 = vmatpush1.bf16.xpose.msra.mxu0 0
        %482 = vmatprep.subr.bf16.mxu0 0
        %483 = vmatpush1.bf16.xpose.msra.mxu0 0
        %484 = vmatprep.subr.bf16.mxu0 0
        %485 = vmatpush1.bf16.xpose.msra.mxu0 0
        %486 = vmatprep.subr.bf16.mxu0 0
        %487 = vmatpush1.bf16.xpose.msra.mxu0 0
        %488 = vmatprep.subr.bf16.mxu0 0
        %489 = vmatpush1.bf16.xpose.msra.mxu0 0
        %490 = vmatprep.subr.bf16.mxu0 0
        %491 = vmatpush1.bf16.xpose.msra.mxu0 0
        %492 = vmatprep.subr.bf16.mxu0 0
        %493 = vmatpush1.bf16.xpose.msra.mxu0 0
        %494 = vmatprep.subr.bf16.mxu0 0
        %495 = vmatpush1.bf16.xpose.msra.mxu0 0
        %496 = vmatprep.subr.bf16.mxu0 0
        %497 = vmatpush1.bf16.xpose.msra.mxu0 0
        %498 = vmatprep.subr.bf16.mxu0 0
        %499 = vmatpush1.bf16.xpose.msra.mxu0 0
        %500 = vmatprep.subr.bf16.mxu0 0
        %501 = vmatpush1.bf16.xpose.msra.mxu0 0
        %502 = vmatprep.subr.bf16.mxu0 0
        %503 = vmatpush1.bf16.xpose.msra.mxu0 0
        %504 = vmatprep.subr.bf16.mxu0 0
        %505 = vmatpush1.bf16.xpose.msra.mxu0 0
        %506 = vmatprep.subr.bf16.mxu0 0
        %507 = vmatpush1.bf16.xpose.msra.mxu0 0
        %508 = vmatprep.mubr.bf16.mxu0 0
        %509 = vmatmul.mubr.bf16.gmra.mrb[0].mxu0 %v471
        %v510 = vpop.f32.mrb[0].mxu0
        %v511 = vadd.f32 %v346, %v510
        %v512 = vpop.f32.mrb[0].mxu0
        %v513 = vpop.f32.mrb[0].mxu0
        %v514 = vpop.f32.mrb[0].mxu0
        %515 = vdwg.mxu0
        %v516 = vsel %vm353, %v511, -inf
        %517 = vmax.xlane.f32.xlu0 %v516
        %v518 = vpop.xlane.xlu0 %517
        %v519 = vsub.f32 %v511, %v518
        %v520 = vmul.f32 %v519, 1.442695
        %v521 = vpow.pop %v520
        %v522 = vsel %vm353, %v521, 0.0
        %523 = vadd.xlane.f32.xlu0 %v522
        %v524 = vpop.xlane.xlu0 %523
        %v525 = vpack.c.bf16 %v521, %v521
        %526 = vrot.lane.b32.xlu0 %v465, 56
        %v527 = vpop.permute.xlu0 %526
        %v529 = vsel %vm353, %v525, 0
        %v532 = vsel %vm415, %v527, 0
        %534 = vmatprep.subr.bf16.mxu0 0
        %535 = vmatpush1.bf16.msra.mxu0 %v532
        %536 = vmatprep.subr.bf16.mxu0 0
        %537 = vmatpush1.bf16.msra.mxu0 0
        %538 = vmatprep.subr.bf16.mxu0 0
        %539 = vmatpush1.bf16.msra.mxu0 0
        %540 = vmatprep.subr.bf16.mxu0 0
        %541 = vmatpush1.bf16.msra.mxu0 0
        %542 = vmatprep.subr.bf16.mxu0 0
        %543 = vmatpush1.bf16.msra.mxu0 0
        %544 = vmatprep.subr.bf16.mxu0 0
        %545 = vmatpush1.bf16.msra.mxu0 0
        %546 = vmatprep.subr.bf16.mxu0 0
        %547 = vmatpush1.bf16.msra.mxu0 0
        %548 = vmatprep.subr.bf16.mxu0 0
        %549 = vmatpush1.bf16.msra.mxu0 0
        %550 = vmatprep.subr.bf16.mxu0 0
        %551 = vmatpush1.bf16.msra.mxu0 0
        %552 = vmatprep.subr.bf16.mxu0 0
        %553 = vmatpush1.bf16.msra.mxu0 0
        %554 = vmatprep.subr.bf16.mxu0 0
        %555 = vmatpush1.bf16.msra.mxu0 0
        %556 = vmatprep.subr.bf16.mxu0 0
        %557 = vmatpush1.bf16.msra.mxu0 0
        %558 = vmatprep.subr.bf16.mxu0 0
        %559 = vmatpush1.bf16.msra.mxu0 0
        %560 = vmatprep.subr.bf16.mxu0 0
        %561 = vmatpush1.bf16.msra.mxu0 0
        %562 = vmatprep.subr.bf16.mxu0 0
        %563 = vmatpush1.bf16.msra.mxu0 0
        %564 = vmatprep.subr.bf16.mxu0 0
        %565 = vmatpush1.bf16.msra.mxu0 0
        %566 = vmatprep.mubr.bf16.mxu0 0
        %567 = vmatmul.mubr.bf16.gmra.mrb[0].mxu0 %v529
        %v568 = vpop.f32.mrb[0].mxu0
        %v569 = vadd.f32 0.0, %v568
        %v570 = vpop.f32.mrb[0].mxu0
        %v571 = vpop.f32.mrb[0].mxu0
        %v572 = vpop.f32.mrb[0].mxu0
        %573 = vdwg.mxu0
        %v574 = vrcp.pop %v524
        %v575 = vmul.f32 %v569, %v574
        %v576 = vpack.c.bf16 %v575, %v575
        %v577 = vld [vmem:[#allocation2] sm:$0xf]
        %v579 = vunpack.c.l.b16 %v577
        %v580 = vpack.c.b16 %v579, %v579
        %581 = vrot.lane.b32.xlu0 %v580, 112
        %v582 = vpop.permute.xlu0 %581
        %583 = vrot.lane.b32.xlu0 %v580, 80
        %v584 = vpop.permute.xlu0 %583
        %v586 = vsel %vm353, %v582, 0
        %v589 = vsel %vm353, %v584, 0
        %591 = vmatprep.subr.bf16.mxu0 0
        %592 = vmatpush1.bf16.xpose.msra.mxu0 %v589
        %593 = vmatprep.subr.bf16.mxu0 0
        %594 = vmatpush1.bf16.xpose.msra.mxu0 0
        %595 = vmatprep.subr.bf16.mxu0 0
        %596 = vmatpush1.bf16.xpose.msra.mxu0 0
        %597 = vmatprep.subr.bf16.mxu0 0
        %598 = vmatpush1.bf16.xpose.msra.mxu0 0
        %599 = vmatprep.subr.bf16.mxu0 0
        %600 = vmatpush1.bf16.xpose.msra.mxu0 0
        %601 = vmatprep.subr.bf16.mxu0 0
        %602 = vmatpush1.bf16.xpose.msra.mxu0 0
        %603 = vmatprep.subr.bf16.mxu0 0
        %604 = vmatpush1.bf16.xpose.msra.mxu0 0
        %605 = vmatprep.subr.bf16.mxu0 0
        %606 = vmatpush1.bf16.xpose.msra.mxu0 0
        %607 = vmatprep.subr.bf16.mxu0 0
        %608 = vmatpush1.bf16.xpose.msra.mxu0 0
        %609 = vmatprep.subr.bf16.mxu0 0
        %610 = vmatpush1.bf16.xpose.msra.mxu0 0
        %611 = vmatprep.subr.bf16.mxu0 0
        %612 = vmatpush1.bf16.xpose.msra.mxu0 0
        %613 = vmatprep.subr.bf16.mxu0 0
        %614 = vmatpush1.bf16.xpose.msra.mxu0 0
        %615 = vmatprep.subr.bf16.mxu0 0
        %616 = vmatpush1.bf16.xpose.msra.mxu0 0
        %617 = vmatprep.subr.bf16.mxu0 0
        %618 = vmatpush1.bf16.xpose.msra.mxu0 0
        %619 = vmatprep.subr.bf16.mxu0 0
        %620 = vmatpush1.bf16.xpose.msra.mxu0 0
        %621 = vmatprep.subr.bf16.mxu0 0
        %622 = vmatpush1.bf16.xpose.msra.mxu0 0
        %623 = vmatprep.mubr.bf16.mxu0 0
        %624 = vmatmul.mubr.bf16.gmra.mrb[0].mxu0 %v586
        %v625 = vpop.f32.mrb[0].mxu0
        %v626 = vadd.f32 %v346, %v625
        %v627 = vpop.f32.mrb[0].mxu0
        %v628 = vpop.f32.mrb[0].mxu0
        %v629 = vpop.f32.mrb[0].mxu0
        %630 = vdwg.mxu0
        %v631 = vsel %vm353, %v626, -inf
        %632 = vmax.xlane.f32.xlu0 %v631
        %v633 = vpop.xlane.xlu0 %632
        %v634 = vsub.f32 %v626, %v633
        %v635 = vmul.f32 %v634, 1.442695
        %v636 = vpow.pop %v635
        %v637 = vsel %vm353, %v636, 0.0
        %638 = vadd.xlane.f32.xlu0 %v637
        %v639 = vpop.xlane.xlu0 %638
        %v640 = vpack.c.bf16 %v636, %v636
        %641 = vrot.lane.b32.xlu0 %v580, 48
        %v642 = vpop.permute.xlu0 %641
        %v644 = vsel %vm353, %v640, 0
        %v647 = vsel %vm415, %v642, 0
        %649 = vmatprep.subr.bf16.mxu0 0
        %650 = vmatpush1.bf16.msra.mxu0 %v647
        %651 = vmatprep.subr.bf16.mxu0 0
        %652 = vmatpush1.bf16.msra.mxu0 0
        %653 = vmatprep.subr.bf16.mxu0 0
        %654 = vmatpush1.bf16.msra.mxu0 0
        %655 = vmatprep.subr.bf16.mxu0 0
        %656 = vmatpush1.bf16.msra.mxu0 0
        %657 = vmatprep.subr.bf16.mxu0 0
        %658 = vmatpush1.bf16.msra.mxu0 0
        %659 = vmatprep.subr.bf16.mxu0 0
        %660 = vmatpush1.bf16.msra.mxu0 0
        %661 = vmatprep.subr.bf16.mxu0 0
        %662 = vmatpush1.bf16.msra.mxu0 0
        %663 = vmatprep.subr.bf16.mxu0 0
        %664 = vmatpush1.bf16.msra.mxu0 0
        %665 = vmatprep.subr.bf16.mxu0 0
        %666 = vmatpush1.bf16.msra.mxu0 0
        %667 = vmatprep.subr.bf16.mxu0 0
        %668 = vmatpush1.bf16.msra.mxu0 0
        %669 = vmatprep.subr.bf16.mxu0 0
        %670 = vmatpush1.bf16.msra.mxu0 0
        %671 = vmatprep.subr.bf16.mxu0 0
        %672 = vmatpush1.bf16.msra.mxu0 0
        %673 = vmatprep.subr.bf16.mxu0 0
        %674 = vmatpush1.bf16.msra.mxu0 0
        %675 = vmatprep.subr.bf16.mxu0 0
        %676 = vmatpush1.bf16.msra.mxu0 0
        %677 = vmatprep.subr.bf16.mxu0 0
        %678 = vmatpush1.bf16.msra.mxu0 0
        %679 = vmatprep.subr.bf16.mxu0 0
        %680 = vmatpush1.bf16.msra.mxu0 0
        %681 = vmatprep.mubr.bf16.mxu0 0
        %682 = vmatmul.mubr.bf16.gmra.mrb[0].mxu0 %v644
        %v683 = vpop.f32.mrb[0].mxu0
        %v684 = vadd.f32 0.0, %v683
        %v685 = vpop.f32.mrb[0].mxu0
        %v686 = vpop.f32.mrb[0].mxu0
        %v687 = vpop.f32.mrb[0].mxu0
        %688 = vdwg.mxu0
        %v689 = vrcp.pop %v639
        %v690 = vmul.f32 %v684, %v689
        %v691 = vpack.c.bf16 %v690, %v690
        %v692 = vld [vmem:[#allocation2] sm:$0xf]
        %v694 = vunpack.c.l.b16 %v692
        %v695 = vpack.c.b16 %v694, %v694
        %696 = vrot.lane.b32.xlu0 %v695, 104
        %v697 = vpop.permute.xlu0 %696
        %698 = vrot.lane.b32.xlu0 %v695, 72
        %v699 = vpop.permute.xlu0 %698
        %v701 = vsel %vm353, %v697, 0
        %v704 = vsel %vm353, %v699, 0
        %706 = vmatprep.subr.bf16.mxu0 0
        %707 = vmatpush1.bf16.xpose.msra.mxu0 %v704
        %708 = vmatprep.subr.bf16.mxu0 0
        %709 = vmatpush1.bf16.xpose.msra.mxu0 0
        %710 = vmatprep.subr.bf16.mxu0 0
        %711 = vmatpush1.bf16.xpose.msra.mxu0 0
        %712 = vmatprep.subr.bf16.mxu0 0
        %713 = vmatpush1.bf16.xpose.msra.mxu0 0
        %714 = vmatprep.subr.bf16.mxu0 0
        %715 = vmatpush1.bf16.xpose.msra.mxu0 0
        %716 = vmatprep.subr.bf16.mxu0 0
        %717 = vmatpush1.bf16.xpose.msra.mxu0 0
        %718 = vmatprep.subr.bf16.mxu0 0
        %719 = vmatpush1.bf16.xpose.msra.mxu0 0
        %720 = vmatprep.subr.bf16.mxu0 0
        %721 = vmatpush1.bf16.xpose.msra.mxu0 0
        %722 = vmatprep.subr.bf16.mxu0 0
        %723 = vmatpush1.bf16.xpose.msra.mxu0 0
        %724 = vmatprep.subr.bf16.mxu0 0
        %725 = vmatpush1.bf16.xpose.msra.mxu0 0
        %726 = vmatprep.subr.bf16.mxu0 0
        %727 = vmatpush1.bf16.xpose.msra.mxu0 0
        %728 = vmatprep.subr.bf16.mxu0 0
        %729 = vmatpush1.bf16.xpose.msra.mxu0 0
        %730 = vmatprep.subr.bf16.mxu0 0
        %731 = vmatpush1.bf16.xpose.msra.mxu0 0
        %732 = vmatprep.subr.bf16.mxu0 0
        %733 = vmatpush1.bf16.xpose.msra.mxu0 0
        %734 = vmatprep.subr.bf16.mxu0 0
        %735 = vmatpush1.bf16.xpose.msra.mxu0 0
        %736 = vmatprep.subr.bf16.mxu0 0
        %737 = vmatpush1.bf16.xpose.msra.mxu0 0
        %738 = vmatprep.mubr.bf16.mxu0 0
        %739 = vmatmul.mubr.bf16.gmra.mrb[0].mxu0 %v701
        %v740 = vpop.f32.mrb[0].mxu0
        %v741 = vadd.f32 %v346, %v740
        %v742 = vpop.f32.mrb[0].mxu0
        %v743 = vpop.f32.mrb[0].mxu0
        %v744 = vpop.f32.mrb[0].mxu0
        %745 = vdwg.mxu0
        %v746 = vsel %vm353, %v741, -inf
        %747 = vmax.xlane.f32.xlu0 %v746
        %v748 = vpop.xlane.xlu0 %747
        %v749 = vsub.f32 %v741, %v748
        %v750 = vmul.f32 %v749, 1.442695
        %v751 = vpow.pop %v750
        %v752 = vsel %vm353, %v751, 0.0
        %753 = vadd.xlane.f32.xlu0 %v752
        %v754 = vpop.xlane.xlu0 %753
        %v755 = vpack.c.bf16 %v751, %v751
        %756 = vrot.lane.b32.xlu0 %v695, 40
        %v757 = vpop.permute.xlu0 %756
        %v759 = vsel %vm353, %v755, 0
        %v762 = vsel %vm415, %v757, 0
        %764 = vmatprep.subr.bf16.mxu0 0
        %765 = vmatpush1.bf16.msra.mxu0 %v762
        %766 = vmatprep.subr.bf16.mxu0 0
        %767 = vmatpush1.bf16.msra.mxu0 0
        %768 = vmatprep.subr.bf16.mxu0 0
        %769 = vmatpush1.bf16.msra.mxu0 0
        %770 = vmatprep.subr.bf16.mxu0 0
        %771 = vmatpush1.bf16.msra.mxu0 0
        %772 = vmatprep.subr.bf16.mxu0 0
        %773 = vmatpush1.bf16.msra.mxu0 0
        %774 = vmatprep.subr.bf16.mxu0 0
        %775 = vmatpush1.bf16.msra.mxu0 0
        %776 = vmatprep.subr.bf16.mxu0 0
        %777 = vmatpush1.bf16.msra.mxu0 0
        %778 = vmatprep.subr.bf16.mxu0 0
        %779 = vmatpush1.bf16.msra.mxu0 0
        %780 = vmatprep.subr.bf16.mxu0 0
        %781 = vmatpush1.bf16.msra.mxu0 0
        %782 = vmatprep.subr.bf16.mxu0 0
        %783 = vmatpush1.bf16.msra.mxu0 0
        %784 = vmatprep.subr.bf16.mxu0 0
        %785 = vmatpush1.bf16.msra.mxu0 0
        %786 = vmatprep.subr.bf16.mxu0 0
        %787 = vmatpush1.bf16.msra.mxu0 0
        %788 = vmatprep.subr.bf16.mxu0 0
        %789 = vmatpush1.bf16.msra.mxu0 0
        %790 = vmatprep.subr.bf16.mxu0 0
        %791 = vmatpush1.bf16.msra.mxu0 0
        %792 = vmatprep.subr.bf16.mxu0 0
        %793 = vmatpush1.bf16.msra.mxu0 0
        %794 = vmatprep.subr.bf16.mxu0 0
        %795 = vmatpush1.bf16.msra.mxu0 0
        %796 = vmatprep.mubr.bf16.mxu0 0
        %797 = vmatmul.mubr.bf16.gmra.mrb[0].mxu0 %v759
        %v798 = vpop.f32.mrb[0].mxu0
        %v799 = vadd.f32 0.0, %v798
        %v800 = vpop.f32.mrb[0].mxu0
        %v801 = vpop.f32.mrb[0].mxu0
        %v802 = vpop.f32.mrb[0].mxu0
        %803 = vdwg.mxu0
        %v804 = vrcp.pop %v754
        %v805 = vmul.f32 %v799, %v804
        %v806 = vpack.c.bf16 %v805, %v805
        %808 = vrot.lane.b32.xlu0 %v576, 8
        %v809 = vpop.permute.xlu0 %808
        %811 = vrot.lane.b32.xlu0 %v691, 16
        %v812 = vpop.permute.xlu0 %811
        %814 = vrot.lane.b32.xlu0 %v806, 24
        %v815 = vpop.permute.xlu0 %814
        %v818 = vsel %vm353, %v461, %v809
        %vm819 = vcmask 130048
        %v821 = vsel %vm819, %v818, %v812
        %vm822 = vcmask 195584
        %v824 = vsel %vm822, %v821, %v815
        %vm826 = vcmask 257024
        %827 = vst.msk [vmem:[#allocation3] sm:$0xf] %vm826, %v824
        %v828 = vld [vmem:[#allocation3] sm:$0xf]
        %v829 = vld [vmem:[#allocation9] sm:$0xf]
        %v830 = vld [vmem:[#allocation9 + $0x4] sm:$0xf]
        %v831 = vld [vmem:[#allocation9 + $0x8] sm:$0xf]
        %v832 = vld [vmem:[#allocation9 + $0xc] sm:$0xf]
        %v833 = vld [vmem:[%s4] sm:$0x1]
        %v835 = vlaneseq
        %v836 = vshrl.u32 %v835, 7
        %v837 = vsub.s32 0, %v836
        %v838 = vrot.slane %v833, %v837
        %v844 = vunpack.c.l.b16 %v829
        %v845 = vunpack.c.l.b16 %v830
        %v846 = vunpack.c.l.b16 %v831
        %v847 = vunpack.c.l.b16 %v832
        %v848 = vpack.c.b16 %v845, %v844
        %v849 = vpack.c.b16 %v847, %v846
        %v853 = vsel %vm294, %v828, 0
        %855 = vmatprep.subr.bf16.mxu0 0
        %856 = vmatpush1.bf16.msra.mxu0 %v848
        %857 = vmatprep.subr.bf16.mxu0 0
        %858 = vmatpush1.bf16.msra.mxu0 %v849
        %859 = vmatprep.subr.bf16.mxu0 0
        %860 = vmatpush1.bf16.msra.mxu0 0
        %861 = vmatprep.subr.bf16.mxu0 0
        %862 = vmatpush1.bf16.msra.mxu0 0
        %863 = vmatprep.subr.bf16.mxu0 0
        %864 = vmatpush1.bf16.msra.mxu0 0
        %865 = vmatprep.subr.bf16.mxu0 0
        %866 = vmatpush1.bf16.msra.mxu0 0
        %867 = vmatprep.subr.bf16.mxu0 0
        %868 = vmatpush1.bf16.msra.mxu0 0
        %869 = vmatprep.subr.bf16.mxu0 0
        %870 = vmatpush1.bf16.msra.mxu0 0
        %871 = vmatprep.subr.bf16.mxu0 0
        %872 = vmatpush1.bf16.msra.mxu0 0
        %873 = vmatprep.subr.bf16.mxu0 0
        %874 = vmatpush1.bf16.msra.mxu0 0
        %875 = vmatprep.subr.bf16.mxu0 0
        %876 = vmatpush1.bf16.msra.mxu0 0
        %877 = vmatprep.subr.bf16.mxu0 0
        %878 = vmatpush1.bf16.msra.mxu0 0
        %879 = vmatprep.subr.bf16.mxu0 0
        %880 = vmatpush1.bf16.msra.mxu0 0
        %881 = vmatprep.subr.bf16.mxu0 0
        %882 = vmatpush1.bf16.msra.mxu0 0
        %883 = vmatprep.subr.bf16.mxu0 0
        %884 = vmatpush1.bf16.msra.mxu0 0
        %885 = vmatprep.subr.bf16.mxu0 0
        %886 = vmatpush1.bf16.msra.mxu0 0
        %887 = vmatprep.mubr.bf16.mxu0 0
        %888 = vmatmul.mubr.bf16.gmra.mrb[0].mxu0 %v853
        %v889 = vpop.f32.mrb[0].mxu0
        %v890 = vadd.f32 %v838, %v889
        %v891 = vpop.f32.mrb[0].mxu0
        %v892 = vpop.f32.mrb[0].mxu0
        %v893 = vpop.f32.mrb[0].mxu0
        %894 = vdwg.mxu0
        %895 = vst.msk [vmem:[%s268] sm:$0xff] %vm294, %v890
        %s896 = sand.u32 %s141, 1
        %s897 = scalar_lea.sflag [#allocation6], %s896
        %s898 = sand.u32 %s141, 1
        %s899 = smul.addr %s898, 8
        %s900 = scalar_lea.vmem [#allocation10], %s899
        // Predicated region
        $region53: #{tpu_custom_call.1} parent=39 // pred_check
          %p901 = pneg %p151
        $region54: #{tpu_custom_call.1} parent=39 // pred_check_branch
          %903 = sbr.rel (%p901) target = $region56
        $region55: #{tpu_custom_call.1} parent=39 // pred_region
          %s905 = ssub.s32 128, 128
          %906 = vsyncadd %s897, %s905
          %s907 = smul.addr %s23, 128
          %s908 = scalar_lea.hbm %s5, %s907
          %s910 = sshll.u32 %s900, 4
          %s911 = int_to_ptr.vmem [resolvable:$true] %s910
          %913 = dma.vmem_to_hbm [thread:$0]  %s911, 128, %s908, %s897
        $region56: #{tpu_custom_call.1} parent=39 // pred_fallthru
          _
      $region40: #{tpu_custom_call.1} parent=5 // pred_fallthru
        _
      %p914 = scmp.le.s32.totalorder 2, %s18
      // Predicated region
      $region57: #{tpu_custom_call.1} parent=5 // pred_check
        %p915 = pneg %p914
      $region58: #{tpu_custom_call.1} parent=5 // pred_check_branch
        %917 = sbr.rel (%p915) target = $region60
      $region59: #{tpu_custom_call.1} parent=5 // pred_region
        %s918 = ssub.s32 %s18, 2
        // Predicated region
        $region61: #{tpu_custom_call.1} parent=59 // pred_check
          %p919 = pneg %p157
        $region62: #{tpu_custom_call.1} parent=59 // pred_check_branch
          %921 = sbr.rel (%p919) target = $region64
        $region63: #{tpu_custom_call.1} parent=59 // pred_region
          %s922 = sand.u32 %s142, 1
          %s923 = scalar_lea.sflag [#allocation6], %s922
          %s924 = sand.u32 %s142, 1
          %s925 = smul.addr %s924, 8
          %s926 = scalar_lea.vmem [#allocation10], %s925
          %927 = dma.done %s923, 128
        $region64: #{tpu_custom_call.1} parent=59 // pred_fallthru
          _
      $region60: #{tpu_custom_call.1} parent=5 // pred_fallthru
        _
    $region6: #{tpu_custom_call.1} parent=1 // loop_footer
      %s22 = sadd.s32 1, %s18
    $region7: #{tpu_custom_call.1} parent=1 // loop_footer_branch
      %17 = sbr.rel target = $region3
    $region8: #{tpu_custom_call.1} parent=1 // loop_exit
      _
    %928 = vsyncpa [#allocation5], 1
    %s929 = scalar_lea.sflag [#allocation5], 1
    %930 = vsyncpa %s929, 1
    %931 = vsyncpa [#allocation8], 1
    %932 = vsyncpa [#allocation6], 1
    %s933 = scalar_lea.sflag [#allocation6], 1
    %934 = vsyncpa %s933, 1

</llo_original>
